<compile_context>
chip_gen: v7x
topology: tpu7x:2x2x1
jax: 0.10.0
libtpu: 0.0.40
codegen_flags: <defaults>
</compile_context>

<pallas_src>
import math

import jax
import jax.numpy as jnp
from jax.experimental import pallas as pl
from jax.experimental.pallas import tpu as pltpu


def _round_up(x, m):
    return ((x + m - 1) // m) * m


def actor_kernel(x_ref, w1_ref, b1_ref, w2_ref, b2_ref, w3_ref, b3_ref, o_ref):
    # x / W are bf16; every dot accumulates in f32. Bias add, ReLU and the
    # log_softmax stay in f32 (v5e has no bf16 VPU/EUP path).
    x = x_ref[...]

    # fc1 + relu
    h1 = jnp.dot(x, w1_ref[...], preferred_element_type=jnp.float32) + b1_ref[...]
    h1 = jnp.maximum(h1, 0.0)

    # fc2 + relu  (cast activation to bf16 only for the MXU operand)
    h2 = (
        jnp.dot(h1.astype(w2_ref.dtype), w2_ref[...], preferred_element_type=jnp.float32)
        + b2_ref[...]
    )
    h2 = jnp.maximum(h2, 0.0)

    # fc3
    z = (
        jnp.dot(h2.astype(w3_ref.dtype), w3_ref[...], preferred_element_type=jnp.float32)
        + b3_ref[...]
    )

    # log_softmax along dim=1 (numerically stable, f32)
    m = jnp.max(z, axis=-1, keepdims=True)
    s = z - m
    lse = jnp.log(jnp.sum(jnp.exp(s), axis=-1, keepdims=True))
    o_ref[...] = (s - lse).astype(o_ref.dtype)


def actor_forward(x, params, *, tile_b=None):
    """Runs the fused ActorNetwork forward. Returns log_softmax logits (B, A)."""
    w1, b1, w2, b2, w3, b3 = params
    batch = x.shape[0]
    state_dim = x.shape[1]
    hidden = w1.shape[1]
    action_dim = w3.shape[1]

    # Tile the batch in multiples of 8 sublanes; cap so the per-step VMEM
    # footprint stays tiny even under v7x's 64 MiB VMEM.
    if tile_b is None:
        tile_b = min(512, _round_up(max(batch, 1), 8))
    tile_b = max(8, _round_up(tile_b, 8))

    b_pad = _round_up(batch, tile_b)
    if b_pad != batch:
        x = jnp.pad(x, ((0, b_pad - batch), (0, 0)))

    # bf16 MXU operands; biases stay f32.
    x_bf = x.astype(jnp.bfloat16)
    w1_bf = w1.astype(jnp.bfloat16)
    w2_bf = w2.astype(jnp.bfloat16)
    w3_bf = w3.astype(jnp.bfloat16)

    grid = (b_pad // tile_b,)

    flops = 2 * b_pad * (state_dim * hidden + hidden * hidden + hidden * action_dim)
    transcendentals = b_pad * (action_dim + 1)  # exp per logit + log per row
    bytes_accessed = (
        x_bf.size * 2
        + (w1_bf.size + w2_bf.size + w3_bf.size) * 2
        + (b1.size + b2.size + b3.size) * 4
        + b_pad * action_dim * 4
    )

    out = pl.pallas_call(
        actor_kernel,
        out_shape=jax.ShapeDtypeStruct((b_pad, action_dim), jnp.float32),
        grid=grid,
        in_specs=[
            pl.BlockSpec((tile_b, state_dim), lambda i: (i, 0)),   # x: streamed
            pl.BlockSpec((state_dim, hidden), lambda i: (0, 0)),   # w1: resident
            pl.BlockSpec((1, hidden), lambda i: (0, 0)),           # b1
            pl.BlockSpec((hidden, hidden), lambda i: (0, 0)),      # w2
            pl.BlockSpec((1, hidden), lambda i: (0, 0)),           # b2
            pl.BlockSpec((hidden, action_dim), lambda i: (0, 0)),  # w3
            pl.BlockSpec((1, action_dim), lambda i: (0, 0)),       # b3
        ],
        out_specs=pl.BlockSpec((tile_b, action_dim), lambda i: (i, 0)),
        compiler_params=pltpu.CompilerParams(
            dimension_semantics=("parallel",),  # megacore sharding on v7x
        ),
        cost_estimate=pl.CostEstimate(
            flops=flops,
            transcendentals=transcendentals,
            bytes_accessed=bytes_accessed,
        ),
    )(x_bf, w1_bf, b1, w2_bf, b2, w3_bf, b3)

    return out[:batch]


def init_params(key, state_dim, action_dim, hidden_size):
    """Matches ActorNetwork.__init__ + init_weights:
    xavier_uniform_ on weights, bias filled with 0.01.
    Weights stored as (in, out) so forward is x @ W (== PyTorch x @ W.T)."""

    def xavier_uniform(k, fan_in, fan_out):
        bound = math.sqrt(6.0 / (fan_in + fan_out))
        return jax.random.uniform(
            k, (fan_in, fan_out), dtype=jnp.float32, minval=-bound, maxval=bound
        )

    k1, k2, k3 = jax.random.split(key, 3)
    w1 = xavier_uniform(k1, state_dim, hidden_size)
    b1 = jnp.full((1, hidden_size), 0.01, dtype=jnp.float32)
    w2 = xavier_uniform(k2, hidden_size, hidden_size)
    b2 = jnp.full((1, hidden_size), 0.01, dtype=jnp.float32)
    w3 = xavier_uniform(k3, hidden_size, action_dim)
    b3 = jnp.full((1, action_dim), 0.01, dtype=jnp.float32)
    return (w1, b1, w2, b2, w3, b3)


def reference_forward_f32(x, params):
    """Pure-JAX f32 reference of the PyTorch forward (log_softmax output)."""
    w1, b1, w2, b2, w3, b3 = params
    h1 = jax.nn.relu(x @ w1 + b1)
    h2 = jax.nn.relu(h1 @ w2 + b2)
    z = h2 @ w3 + b3
    return jax.nn.log_softmax(z, axis=1)


def reference_forward_bf16(x, params):
    """Pure-JAX reference with the same bf16-operand / f32-accumulate numerics
    as the kernel."""
    w1, b1, w2, b2, w3, b3 = params
    bf = jnp.bfloat16
    h1 = jax.nn.relu(
        jnp.dot(x.astype(bf), w1.astype(bf), preferred_element_type=jnp.float32) + b1
    )
    h2 = jax.nn.relu(
        jnp.dot(h1.astype(bf), w2.astype(bf), preferred_element_type=jnp.float32) + b2
    )
    z = jnp.dot(h2.astype(bf), w3.astype(bf), preferred_element_type=jnp.float32) + b3
    return jax.nn.log_softmax(z, axis=1)


if __name__ == "__main__":
    # Small shapes consistent with the module: batch=2, state_dim=16,
    # hidden_size=32, action_dim=8.
    batch, state_dim, action_dim, hidden_size = 2, 16, 8, 32

    key = jax.random.PRNGKey(0)
    k_params, k_x = jax.random.split(key)
    params = init_params(k_params, state_dim, action_dim, hidden_size)
    x = jax.random.normal(k_x, (batch, state_dim), dtype=jnp.float32)

    out = actor_forward(x, params)
    out = jax.block_until_ready(out)

    ref_bf16 = reference_forward_bf16(x, params)
    ref_f32 = reference_forward_f32(x, params)

    assert out.shape == (batch, action_dim)
    assert jnp.all(jnp.isfinite(out))
    # Bit-faithful to the same bf16-operand / f32-accumulate math:
    assert jnp.allclose(out, ref_bf16, atol=1e-4, rtol=1e-4)
    # Semantically close to the full-f32 PyTorch forward:
    assert jnp.allclose(out, ref_f32, atol=1e-1, rtol=1e-1)
    # Valid log-probabilities: rows exponentiate to ~1.
    assert jnp.allclose(jnp.sum(jnp.exp(out), axis=1), 1.0, atol=1e-3)

    print("KERNEL_OK")
</pallas_src>

<mosaic_0001>
module attributes {stable_mosaic.version = 11 : i64} {
  func.func @actor_kernel(%arg0: i32, %arg1: memref<8x16xbf16, #tpu.memory_space<vmem>>, %arg2: memref<16x32xbf16, #tpu.memory_space<vmem>>, %arg3: memref<1x32xf32, #tpu.memory_space<vmem>>, %arg4: memref<32x32xbf16, #tpu.memory_space<vmem>>, %arg5: memref<1x32xf32, #tpu.memory_space<vmem>>, %arg6: memref<32x8xbf16, #tpu.memory_space<vmem>>, %arg7: memref<1x8xf32, #tpu.memory_space<vmem>>, %arg8: memref<8x8xf32, #tpu.memory_space<vmem>>) attributes {dimension_semantics = [#tpu.dimension_semantics<parallel>], iteration_bounds = array<i64: 1>, scalar_prefetch = 0 : i64, scratch_operands = 0 : i64, tpu.core_type = #tpu.core_type<tc>, window_params = [{transform_indices = @transform_0, window_bounds = array<i64: 8, 16>}, {pipeline_mode = #tpu.pipeline_mode<synchronous>, transform_indices = @transform_1, window_bounds = array<i64: 16, 32>}, {pipeline_mode = #tpu.pipeline_mode<synchronous>, transform_indices = @transform_2, window_bounds = array<i64: 1, 32>}, {pipeline_mode = #tpu.pipeline_mode<synchronous>, transform_indices = @transform_3, window_bounds = array<i64: 32, 32>}, {pipeline_mode = #tpu.pipeline_mode<synchronous>, transform_indices = @transform_4, window_bounds = array<i64: 1, 32>}, {pipeline_mode = #tpu.pipeline_mode<synchronous>, transform_indices = @transform_5, window_bounds = array<i64: 32, 8>}, {pipeline_mode = #tpu.pipeline_mode<synchronous>, transform_indices = @transform_6, window_bounds = array<i64: 1, 8>}, {transform_indices = @transform_7, window_bounds = array<i64: 8, 8>}]} {
    %c0 = arith.constant 0 : index
    %c0_0 = arith.constant 0 : index
    %0 = vector.load %arg1[%c0, %c0_0] : memref<8x16xbf16, #tpu.memory_space<vmem>>, vector<8x16xbf16>
    %c0_1 = arith.constant 0 : index
    %c0_2 = arith.constant 0 : index
    %1 = vector.load %arg2[%c0_1, %c0_2] : memref<16x32xbf16, #tpu.memory_space<vmem>>, vector<16x32xbf16>
    %cst = arith.constant dense<0.000000e+00> : vector<8x32xf32>
    %2 = tpu.matmul %0, %1, %cst {dimension_numbers = #tpu.dot_dimension_numbers<[1], [0], [0], [1], [0, 0, 1, 1], [], []>} : vector<8x16xbf16>, vector<16x32xbf16>, vector<8x32xf32> -> vector<8x32xf32>
    %c0_3 = arith.constant 0 : index
    %c0_4 = arith.constant 0 : index
    %3 = vector.load %arg3[%c0_3, %c0_4] : memref<1x32xf32, #tpu.memory_space<vmem>>, vector<1x32xf32>
    %4 = vector.broadcast %3 : vector<1x32xf32> to vector<8x32xf32>
    %5 = arith.addf %2, %4 : vector<8x32xf32>
    %cst_5 = arith.constant 0.000000e+00 : f32
    %6 = vector.broadcast %cst_5 : f32 to vector<8x32xf32>
    %7 = arith.maximumf %5, %6 : vector<8x32xf32>
    %8 = arith.truncf %7 : vector<8x32xf32> to vector<8x32xbf16>
    %c0_6 = arith.constant 0 : index
    %c0_7 = arith.constant 0 : index
    %9 = vector.load %arg4[%c0_6, %c0_7] : memref<32x32xbf16, #tpu.memory_space<vmem>>, vector<32x32xbf16>
    %cst_8 = arith.constant dense<0.000000e+00> : vector<8x32xf32>
    %10 = tpu.matmul %8, %9, %cst_8 {dimension_numbers = #tpu.dot_dimension_numbers<[1], [0], [0], [1], [0, 0, 1, 1], [], []>} : vector<8x32xbf16>, vector<32x32xbf16>, vector<8x32xf32> -> vector<8x32xf32>
    %c0_9 = arith.constant 0 : index
    %c0_10 = arith.constant 0 : index
    %11 = vector.load %arg5[%c0_9, %c0_10] : memref<1x32xf32, #tpu.memory_space<vmem>>, vector<1x32xf32>
    %12 = vector.broadcast %11 : vector<1x32xf32> to vector<8x32xf32>
    %13 = arith.addf %10, %12 : vector<8x32xf32>
    %cst_11 = arith.constant 0.000000e+00 : f32
    %14 = vector.broadcast %cst_11 : f32 to vector<8x32xf32>
    %15 = arith.maximumf %13, %14 : vector<8x32xf32>
    %16 = arith.truncf %15 : vector<8x32xf32> to vector<8x32xbf16>
    %c0_12 = arith.constant 0 : index
    %c0_13 = arith.constant 0 : index
    %17 = vector.load %arg6[%c0_12, %c0_13] : memref<32x8xbf16, #tpu.memory_space<vmem>>, vector<32x8xbf16>
    %cst_14 = arith.constant dense<0.000000e+00> : vector<8x8xf32>
    %18 = tpu.matmul %16, %17, %cst_14 {dimension_numbers = #tpu.dot_dimension_numbers<[1], [0], [0], [1], [0, 0, 1, 1], [], []>} : vector<8x32xbf16>, vector<32x8xbf16>, vector<8x8xf32> -> vector<8x8xf32>
    %c0_15 = arith.constant 0 : index
    %c0_16 = arith.constant 0 : index
    %19 = vector.load %arg7[%c0_15, %c0_16] : memref<1x8xf32, #tpu.memory_space<vmem>>, vector<1x8xf32>
    %20 = vector.broadcast %19 : vector<1x8xf32> to vector<8x8xf32>
    %21 = arith.addf %18, %20 : vector<8x8xf32>
    %cst_17 = arith.constant dense<0xFF800000> : vector<8xf32>
    %22 = vector.multi_reduction <maximumf>, %21, %cst_17 [1] : vector<8x8xf32> to vector<8xf32>
    %23 = vector.shape_cast %22 : vector<8xf32> to vector<8x1xf32>
    %24 = vector.broadcast %23 : vector<8x1xf32> to vector<8x8xf32>
    %25 = arith.subf %21, %24 : vector<8x8xf32>
    %26 = math.exp %25 : vector<8x8xf32>
    %cst_18 = arith.constant dense<0.000000e+00> : vector<8xf32>
    %27 = vector.multi_reduction <add>, %26, %cst_18 [1] : vector<8x8xf32> to vector<8xf32>
    %28 = vector.shape_cast %27 : vector<8xf32> to vector<8x1xf32>
    %29 = math.log %28 : vector<8x1xf32>
    %30 = vector.broadcast %29 : vector<8x1xf32> to vector<8x8xf32>
    %31 = arith.subf %25, %30 : vector<8x8xf32>
    %c0_19 = arith.constant 0 : index
    %c0_20 = arith.constant 0 : index
    %32 = vector.load %arg8[%c0_19, %c0_20] : memref<8x8xf32, #tpu.memory_space<vmem>>, vector<8x8xf32>
    tpu.vector_store %arg8[%c0_19, %c0_20], %31 {strides = array<i32>} : memref<8x8xf32, #tpu.memory_space<vmem>>, vector<8x8xf32>,
    return
  }
  func.func @transform_0(%arg0: i32) -> (i32, i32) {
    %c0_i32 = arith.constant 0 : i32
    %c0_i32_0 = arith.constant 0 : i32
    return %arg0, %c0_i32 : i32, i32
  }
  func.func @transform_1(%arg0: i32) -> (i32, i32) {
    %c0_i32 = arith.constant 0 : i32
    %c0_i32_0 = arith.constant 0 : i32
    %c0_i32_1 = arith.constant 0 : i32
    return %c0_i32, %c0_i32_0 : i32, i32
  }
  func.func @transform_2(%arg0: i32) -> (i32, i32) {
    %c0_i32 = arith.constant 0 : i32
    %c0_i32_0 = arith.constant 0 : i32
    %c0_i32_1 = arith.constant 0 : i32
    return %c0_i32, %c0_i32_0 : i32, i32
  }
  func.func @transform_3(%arg0: i32) -> (i32, i32) {
    %c0_i32 = arith.constant 0 : i32
    %c0_i32_0 = arith.constant 0 : i32
    %c0_i32_1 = arith.constant 0 : i32
    return %c0_i32, %c0_i32_0 : i32, i32
  }
  func.func @transform_4(%arg0: i32) -> (i32, i32) {
    %c0_i32 = arith.constant 0 : i32
    %c0_i32_0 = arith.constant 0 : i32
    %c0_i32_1 = arith.constant 0 : i32
    return %c0_i32, %c0_i32_0 : i32, i32
  }
  func.func @transform_5(%arg0: i32) -> (i32, i32) {
    %c0_i32 = arith.constant 0 : i32
    %c0_i32_0 = arith.constant 0 : i32
    %c0_i32_1 = arith.constant 0 : i32
    return %c0_i32, %c0_i32_0 : i32, i32
  }
  func.func @transform_6(%arg0: i32) -> (i32, i32) {
    %c0_i32 = arith.constant 0 : i32
    %c0_i32_0 = arith.constant 0 : i32
    %c0_i32_1 = arith.constant 0 : i32
    return %c0_i32, %c0_i32_0 : i32, i32
  }
  func.func @transform_7(%arg0: i32) -> (i32, i32) {
    %c0_i32 = arith.constant 0 : i32
    %c0_i32_0 = arith.constant 0 : i32
    return %arg0, %c0_i32 : i32, i32
  }
}

</mosaic_0001>

<llo_original>
// kernel: tpu_custom_call.1
$region0: #{tpu_custom_call.1}
  #allocation0 [shape = 'u32[]', space=smem, size = 0x4, offset = 0x4, fixed_abs, tag = 'smem constant byte address 0x4 - core index']
  #allocation1 [shape = 'u32[144,128]{1,0:T(1,128)}', space=vmem, size = 0x12000, scoped, tag = 'internal scratch']
  %s0 = inlined_call_operand.vmem [shape: bf16[8,16], index: 0, kind: input, shape index: {}]
  %s1 = inlined_call_operand.vmem [shape: bf16[16,32], index: 1, kind: input, shape index: {}]
  %s2 = inlined_call_operand.vmem [shape: f32[1,32], index: 2, kind: input, shape index: {}]
  %s3 = inlined_call_operand.vmem [shape: bf16[32,32], index: 3, kind: input, shape index: {}]
  %s4 = inlined_call_operand.vmem [shape: f32[1,32], index: 4, kind: input, shape index: {}]
  %s5 = inlined_call_operand.vmem [shape: bf16[32,8], index: 5, kind: input, shape index: {}]
  %s6 = inlined_call_operand.vmem [shape: f32[1,8], index: 6, kind: input, shape index: {}]
  %s7 = inlined_call_operand.hbm [shape: f32[8,8], index: 7, kind: output, shape index: {}]
  %s8 = sld [smem:[#allocation0]]
  $region38: #{tpu_custom_call.1} parent=0
    _
  %s10 = ssub.s32 1, %s8
  %s11 = scalar_select 0, %s10, %s8
  $region1: #{tpu_custom_call.1} parent=0
    #allocation2 [shape = 'u8[4096]{0}', space=vmem, size = 0x1000, scoped, tag = 'output window, operand 0, single buffered']
    #allocation3 [shape = 's32[1]{0}', space=sflag, size = 0x4, scoped, tag = 'scoped memory for tpu_custom_call.1']
    %12 = vsyncpa [#allocation3], 0
    // Predicated region
    $region2: #{tpu_custom_call.1} parent=1 // pred_check
      _
    $region3: #{tpu_custom_call.1} parent=1 // pred_check_branch
      %14 = sbr.rel (0) target = $region5
    $region4: #{tpu_custom_call.1} parent=1 // pred_region
      _
    $region5: #{tpu_custom_call.1} parent=1 // pred_fallthru
      _
    // Predicated region
    $region6: #{tpu_custom_call.1} parent=1 // pred_check
      _
    $region7: #{tpu_custom_call.1} parent=1 // pred_check_branch
      %16 = sbr.rel (0) target = $region9
    $region8: #{tpu_custom_call.1} parent=1 // pred_region
      _
    $region9: #{tpu_custom_call.1} parent=1 // pred_fallthru
      _
    // Predicated region
    $region10: #{tpu_custom_call.1} parent=1 // pred_check
      _
    $region11: #{tpu_custom_call.1} parent=1 // pred_check_branch
      %18 = sbr.rel (0) target = $region13
    $region12: #{tpu_custom_call.1} parent=1 // pred_region
      _
    $region13: #{tpu_custom_call.1} parent=1 // pred_fallthru
      _
    // Predicated region
    $region14: #{tpu_custom_call.1} parent=1 // pred_check
      _
    $region15: #{tpu_custom_call.1} parent=1 // pred_check_branch
      %20 = sbr.rel (0) target = $region17
    $region16: #{tpu_custom_call.1} parent=1 // pred_region
      _
    $region17: #{tpu_custom_call.1} parent=1 // pred_fallthru
      _
    // Predicated region
    $region18: #{tpu_custom_call.1} parent=1 // pred_check
      _
    $region19: #{tpu_custom_call.1} parent=1 // pred_check_branch
      %22 = sbr.rel (0) target = $region21
    $region20: #{tpu_custom_call.1} parent=1 // pred_region
      _
    $region21: #{tpu_custom_call.1} parent=1 // pred_fallthru
      _
    // Predicated region
    $region22: #{tpu_custom_call.1} parent=1 // pred_check
      _
    $region23: #{tpu_custom_call.1} parent=1 // pred_check_branch
      %24 = sbr.rel (0) target = $region25
    $region24: #{tpu_custom_call.1} parent=1 // pred_region
      _
    $region25: #{tpu_custom_call.1} parent=1 // pred_fallthru
      _
    // Predicated region
    $region26: #{tpu_custom_call.1} parent=1 // pred_check
      _
    $region27: #{tpu_custom_call.1} parent=1 // pred_check_branch
      %26 = sbr.rel (0) target = $region29
    $region28: #{tpu_custom_call.1} parent=1 // pred_region
      _
    $region29: #{tpu_custom_call.1} parent=1 // pred_fallthru
      _
    %v28 = vld [vmem:[%s0] sm:$0xf]
    %v29 = vld [vmem:[%s1] sm:$0xf]
    %v30 = vld [vmem:[%s1 + $0x4] sm:$0xf]
    %v31 = vld [vmem:[%s2] sm:$0x1]
    %v33 = vlaneseq
    %v34 = vshrl.u32 %v33, 7
    %v35 = vsub.s32 0, %v34
    %v36 = vrot.slane %v31, %v35
    %v40 = vunpack.c.l.b16 %v29
    %v41 = vunpack.c.l.b16 %v30
    %v42 = vpack.c.b16 %v41, %v40
    %vm44 = vcmask 130048
    %v46 = vsel %vm44, %v28, 0
    %48 = vmatprep.subr.bf16.mxu0 0
    %49 = vmatpush1.bf16.msra.mxu0 %v42
    %50 = vmatprep.subr.bf16.mxu0 0
    %51 = vmatpush1.bf16.msra.mxu0 0
    %52 = vmatprep.subr.bf16.mxu0 0
    %53 = vmatpush1.bf16.msra.mxu0 0
    %54 = vmatprep.subr.bf16.mxu0 0
    %55 = vmatpush1.bf16.msra.mxu0 0
    %56 = vmatprep.subr.bf16.mxu0 0
    %57 = vmatpush1.bf16.msra.mxu0 0
    %58 = vmatprep.subr.bf16.mxu0 0
    %59 = vmatpush1.bf16.msra.mxu0 0
    %60 = vmatprep.subr.bf16.mxu0 0
    %61 = vmatpush1.bf16.msra.mxu0 0
    %62 = vmatprep.subr.bf16.mxu0 0
    %63 = vmatpush1.bf16.msra.mxu0 0
    %64 = vmatprep.subr.bf16.mxu0 0
    %65 = vmatpush1.bf16.msra.mxu0 0
    %66 = vmatprep.subr.bf16.mxu0 0
    %67 = vmatpush1.bf16.msra.mxu0 0
    %68 = vmatprep.subr.bf16.mxu0 0
    %69 = vmatpush1.bf16.msra.mxu0 0
    %70 = vmatprep.subr.bf16.mxu0 0
    %71 = vmatpush1.bf16.msra.mxu0 0
    %72 = vmatprep.subr.bf16.mxu0 0
    %73 = vmatpush1.bf16.msra.mxu0 0
    %74 = vmatprep.subr.bf16.mxu0 0
    %75 = vmatpush1.bf16.msra.mxu0 0
    %76 = vmatprep.subr.bf16.mxu0 0
    %77 = vmatpush1.bf16.msra.mxu0 0
    %78 = vmatprep.subr.bf16.mxu0 0
    %79 = vmatpush1.bf16.msra.mxu0 0
    %80 = vmatprep.mubr.bf16.mxu0 0
    %81 = vmatmul.mubr.bf16.gmra.mrb[0].mxu0 %v46
    %v82 = vpop.f32.mrb[0].mxu0
    %v83 = vadd.f32 %v36, %v82
    %v84 = vpop.f32.mrb[0].mxu0
    %v85 = vpop.f32.mrb[0].mxu0
    %v86 = vpop.f32.mrb[0].mxu0
    %87 = vdwg.mxu0
    %v88 = vmax.f32 %v83, 0.0
    %v89 = vpack.c.bf16 %v88, %v88
    %v90 = vld [vmem:[%s3] sm:$0xf]
    %v91 = vld [vmem:[%s3 + $0x4] sm:$0xf]
    %v92 = vld [vmem:[%s3 + $0x8] sm:$0xf]
    %v93 = vld [vmem:[%s3 + $0xc] sm:$0xf]
    %v94 = vld [vmem:[%s4] sm:$0x1]
    %v96 = vlaneseq
    %v97 = vshrl.u32 %v96, 7
    %v98 = vsub.s32 0, %v97
    %v99 = vrot.slane %v94, %v98
    %v105 = vunpack.c.l.b16 %v90
    %v106 = vunpack.c.l.b16 %v91
    %v107 = vunpack.c.l.b16 %v92
    %v108 = vunpack.c.l.b16 %v93
    %v109 = vpack.c.b16 %v106, %v105
    %v110 = vpack.c.b16 %v108, %v107
    %vm113 = vcmask 261120
    %v115 = vsel %vm113, %v89, 0
    %117 = vmatprep.subr.bf16.mxu0 0
    %118 = vmatpush1.bf16.msra.mxu0 %v109
    %119 = vmatprep.subr.bf16.mxu0 0
    %120 = vmatpush1.bf16.msra.mxu0 %v110
    %121 = vmatprep.subr.bf16.mxu0 0
    %122 = vmatpush1.bf16.msra.mxu0 0
    %123 = vmatprep.subr.bf16.mxu0 0
    %124 = vmatpush1.bf16.msra.mxu0 0
    %125 = vmatprep.subr.bf16.mxu0 0
    %126 = vmatpush1.bf16.msra.mxu0 0
    %127 = vmatprep.subr.bf16.mxu0 0
    %128 = vmatpush1.bf16.msra.mxu0 0
    %129 = vmatprep.subr.bf16.mxu0 0
    %130 = vmatpush1.bf16.msra.mxu0 0
    %131 = vmatprep.subr.bf16.mxu0 0
    %132 = vmatpush1.bf16.msra.mxu0 0
    %133 = vmatprep.subr.bf16.mxu0 0
    %134 = vmatpush1.bf16.msra.mxu0 0
    %135 = vmatprep.subr.bf16.mxu0 0
    %136 = vmatpush1.bf16.msra.mxu0 0
    %137 = vmatprep.subr.bf16.mxu0 0
    %138 = vmatpush1.bf16.msra.mxu0 0
    %139 = vmatprep.subr.bf16.mxu0 0
    %140 = vmatpush1.bf16.msra.mxu0 0
    %141 = vmatprep.subr.bf16.mxu0 0
    %142 = vmatpush1.bf16.msra.mxu0 0
    %143 = vmatprep.subr.bf16.mxu0 0
    %144 = vmatpush1.bf16.msra.mxu0 0
    %145 = vmatprep.subr.bf16.mxu0 0
    %146 = vmatpush1.bf16.msra.mxu0 0
    %147 = vmatprep.subr.bf16.mxu0 0
    %148 = vmatpush1.bf16.msra.mxu0 0
    %149 = vmatprep.mubr.bf16.mxu0 0
    %150 = vmatmul.mubr.bf16.gmra.mrb[0].mxu0 %v115
    %v151 = vpop.f32.mrb[0].mxu0
    %v152 = vadd.f32 %v99, %v151
    %v153 = vpop.f32.mrb[0].mxu0
    %v154 = vpop.f32.mrb[0].mxu0
    %v155 = vpop.f32.mrb[0].mxu0
    %156 = vdwg.mxu0
    %v157 = vmax.f32 %v152, 0.0
    %v158 = vpack.c.bf16 %v157, %v157
    %v159 = vld [vmem:[%s5] sm:$0xf]
    %v160 = vld [vmem:[%s5 + $0x4] sm:$0xf]
    %v161 = vld [vmem:[%s5 + $0x8] sm:$0xf]
    %v162 = vld [vmem:[%s5 + $0xc] sm:$0xf]
    %v163 = vld [vmem:[%s6] sm:$0x1]
    %v165 = vlaneseq
    %v166 = vshrl.u32 %v165, 7
    %v167 = vsub.s32 0, %v166
    %v168 = vrot.slane %v163, %v167
    %v174 = vunpack.c.l.b16 %v159
    %v175 = vunpack.c.l.b16 %v160
    %v176 = vunpack.c.l.b16 %v161
    %v177 = vunpack.c.l.b16 %v162
    %v178 = vpack.c.b16 %v175, %v174
    %v179 = vpack.c.b16 %v177, %v176
    %v183 = vsel %vm113, %v158, 0
    %185 = vmatprep.subr.bf16.mxu0 0
    %186 = vmatpush1.bf16.msra.mxu0 %v178
    %187 = vmatprep.subr.bf16.mxu0 0
    %188 = vmatpush1.bf16.msra.mxu0 %v179
    %189 = vmatprep.subr.bf16.mxu0 0
    %190 = vmatpush1.bf16.msra.mxu0 0
    %191 = vmatprep.subr.bf16.mxu0 0
    %192 = vmatpush1.bf16.msra.mxu0 0
    %193 = vmatprep.subr.bf16.mxu0 0
    %194 = vmatpush1.bf16.msra.mxu0 0
    %195 = vmatprep.subr.bf16.mxu0 0
    %196 = vmatpush1.bf16.msra.mxu0 0
    %197 = vmatprep.subr.bf16.mxu0 0
    %198 = vmatpush1.bf16.msra.mxu0 0
    %199 = vmatprep.subr.bf16.mxu0 0
    %200 = vmatpush1.bf16.msra.mxu0 0
    %201 = vmatprep.subr.bf16.mxu0 0
    %202 = vmatpush1.bf16.msra.mxu0 0
    %203 = vmatprep.subr.bf16.mxu0 0
    %204 = vmatpush1.bf16.msra.mxu0 0
    %205 = vmatprep.subr.bf16.mxu0 0
    %206 = vmatpush1.bf16.msra.mxu0 0
    %207 = vmatprep.subr.bf16.mxu0 0
    %208 = vmatpush1.bf16.msra.mxu0 0
    %209 = vmatprep.subr.bf16.mxu0 0
    %210 = vmatpush1.bf16.msra.mxu0 0
    %211 = vmatprep.subr.bf16.mxu0 0
    %212 = vmatpush1.bf16.msra.mxu0 0
    %213 = vmatprep.subr.bf16.mxu0 0
    %214 = vmatpush1.bf16.msra.mxu0 0
    %215 = vmatprep.subr.bf16.mxu0 0
    %216 = vmatpush1.bf16.msra.mxu0 0
    %217 = vmatprep.mubr.bf16.mxu0 0
    %218 = vmatmul.mubr.bf16.gmra.mrb[0].mxu0 %v183
    %v219 = vpop.f32.mrb[0].mxu0
    %v220 = vadd.f32 %v168, %v219
    %v221 = vpop.f32.mrb[0].mxu0
    %v222 = vpop.f32.mrb[0].mxu0
    %v223 = vpop.f32.mrb[0].mxu0
    %224 = vdwg.mxu0
    %vm225 = vcmask 64512
    %v226 = vsel %vm225, %v220, -inf
    %227 = vmax.xlane.f32.xlu0 %v226
    %v228 = vpop.xlane.xlu0 %227
    %v229 = vsub.f32 %v220, %v228
    %v230 = vmul.f32 %v229, 1.442695
    %v231 = vpow.pop %v230
    %v232 = vsel %vm225, %v231, 0.0
    %233 = vadd.xlane.f32.xlu0 %v232
    %v234 = vpop.xlane.xlu0 %233
    %v235 = vlog2.pop %v234
    %v236 = vmul.f32 %v235, 0.6931472
    %v237 = vsub.f32 %v229, %v236
    %238 = vst.msk [vmem:[#allocation2] sm:$0xff] %vm225, %v237
    // Predicated region
    $region30: #{tpu_custom_call.1} parent=1 // pred_check
      _
    $region31: #{tpu_custom_call.1} parent=1 // pred_check_branch
      %240 = sbr.rel (0) target = $region33
    $region32: #{tpu_custom_call.1} parent=1 // pred_region
      %s242 = ssub.s32 128, 128
      %243 = vsyncadd [#allocation3], %s242
      %s245 = sshll.u32 [#allocation2], 4
      %s246 = int_to_ptr.vmem [resolvable:$true] %s245
      %248 = dma.vmem_to_hbm [thread:$0]  %s246, 128, %s7, [#allocation3]
    $region33: #{tpu_custom_call.1} parent=1 // pred_fallthru
      _
    // Predicated region
    $region34: #{tpu_custom_call.1} parent=1 // pred_check
      _
    $region35: #{tpu_custom_call.1} parent=1 // pred_check_branch
      %250 = sbr.rel (0) target = $region37
    $region36: #{tpu_custom_call.1} parent=1 // pred_region
      %251 = dma.done [#allocation3], 128
    $region37: #{tpu_custom_call.1} parent=1 // pred_fallthru
      _
    %252 = vsyncpa [#allocation3], 1

</llo_original>
